<compile_context>
chip_gen: v5e
topology: v5e:2x2
jax: 0.10.0
libtpu: 0.0.40
codegen_flags: <defaults>
</compile_context>

<pallas_src>
import jax
import jax.numpy as jnp
from jax.experimental import pallas as pl
from jax.experimental.pallas import tpu as pltpu


# ---------------------------------------------------------------------------
# Pallas kernel: fused 3x3 / stride-2 (1-channel) conv + folded bias/BatchNorm
# ---------------------------------------------------------------------------

def _merge_block_kernel(ws_ref, ph_ref, o_ref):
    # ws_ref : (16,) f32 in SMEM.
    #            [0:9] = conv taps (row-major over (ky, kx)) pre-multiplied by the
    #                    BatchNorm scale gamma / sqrt(running_var + eps)
    #            [9]   = folded shift = (conv_bias - running_mean) * scale + beta
    #            [10:] = unused padding
    # ph_ref : (4, Hq, Wq) in VMEM, one batch element.  Phase plane p = py*2 + px
    #          holds x_pad[2*r + py, 2*c + px], i.e. the stride-2 decomposition of
    #          the zero-padded input.  Hq = H_out + 1, Wq = W_out + 1.
    # o_ref  : (H_out, W_out) in VMEM.
    ho, wo = o_ref.shape

    # Start the accumulator from the folded (bias + BN) shift, in f32.
    acc = jnp.full((ho, wo), ws_ref[9], dtype=jnp.float32)

    # The 9 taps are shifted reads of the 4 phase planes:
    #   tap (dy, dx):  x_pad[2*oy + dy, 2*ox + dx]
    #                = phase[(dy % 2) * 2 + (dx % 2)][oy + dy // 2, ox + dx // 2]
    # Static unroll -> 9 lane-/sublane-dense FMAs on the VPU.
    for dy in range(3):
        qy, py = divmod(dy, 2)
        for dx in range(3):
            qx, px = divmod(dx, 2)
            p = py * 2 + px
            tap = ph_ref[p, pl.ds(qy, ho), pl.ds(qx, wo)].astype(jnp.float32)
            acc = acc + tap * ws_ref[dy * 3 + dx]

    o_ref[...] = acc.astype(o_ref.dtype)


# ---------------------------------------------------------------------------
# Wrapper: zero-pad + 4 stride-2 phase planes (~1x data relayout) + pallas_call
# ---------------------------------------------------------------------------

def merge_block_forward(params, x, *, eps=1e-5):
    """x: (B, 1, H, W) -> (B, 1, H_out, W_out), H_out = (H - 1)//2 + 1 (same for W)."""
    B, Cin, H, W = x.shape
    assert Cin == 1, "Merge_Block's conv has a single input/output channel"
    H_out = (H - 1) // 2 + 1
    W_out = (W - 1) // 2 + 1
    Hq = H_out + 1
    Wq = W_out + 1

    # Zero-pad (padding=1 on top/left; enough zeros on bottom/right so every
    # stride-2 phase plane is exactly (Hq, Wq)).  The conv only ever reads
    # padded indices <= 2*H_out (resp. 2*W_out), so the extra zeros are inert.
    xp = jnp.pad(x[:, 0], ((0, 0), (1, 2 * Hq - 1 - H), (1, 2 * Wq - 1 - W)))

    # Four stride-2 phase planes, phase p = py*2 + px  ->  (B, 4, Hq, Wq).
    # This is a one-shot ~1x relayout (no 9x im2col materialization).
    phases = jnp.stack(
        [xp[:, py::2, px::2] for py in range(2) for px in range(2)], axis=1
    )

    # Fold conv bias + eval-mode BatchNorm into the conv weights + one shift,
    # packed into a single SMEM scalar array.
    scale = params["bn_gamma"] / jnp.sqrt(params["bn_var"] + eps)            # (1,)
    shift = (params["conv_b"] - params["bn_mean"]) * scale + params["bn_beta"]  # (1,)
    ws = jnp.concatenate(
        [params["conv_w"].astype(jnp.float32) * scale,   # (9,) folded taps
         shift.astype(jnp.float32),                      # (1,) folded shift
         jnp.zeros((6,), jnp.float32)]                   # pad to (16,)
    )

    # VMEM budget: double-buffered per-image phase block + output block, plus
    # headroom for compiler scratch; clipped below v7x's 64 MiB physical VMEM.
    itemsize = jnp.dtype(x.dtype).itemsize
    block_bytes = (4 * Hq * Wq + H_out * W_out) * itemsize
    vmem_limit = int(min(max(4 * block_bytes + (4 << 20), 16 << 20), 48 << 20))

    out = pl.pallas_call(
        _merge_block_kernel,
        out_shape=jax.ShapeDtypeStruct((B, H_out, W_out), x.dtype),
        grid=(B,),
        in_specs=[
            # Packed scalars: whole array, SMEM, available every grid step.
            pl.BlockSpec(memory_space=pltpu.MemorySpace.SMEM),
            # One batch element's 4 phase planes per grid step.
            pl.BlockSpec((pl.Squeezed(), 4, Hq, Wq), lambda b: (b, 0, 0, 0)),
        ],
        out_specs=pl.BlockSpec((pl.Squeezed(), H_out, W_out), lambda b: (b, 0, 0)),
        compiler_params=pltpu.CompilerParams(
            dimension_semantics=("parallel",),   # shard batch across TCs on v7x
            vmem_limit_bytes=vmem_limit,
        ),
    )(ws, phases)

    return out.reshape(B, 1, H_out, W_out)


# ---------------------------------------------------------------------------
# Parameters (PyTorch layout: Conv2d(1,1,3,3) weight flattened row-major -> (9,))
# ---------------------------------------------------------------------------

def init_params(key):
    kw, kb = jax.random.split(key)
    return {
        "conv_w": jax.random.normal(kw, (9,), jnp.float32) * 0.1,
        "conv_b": jax.random.normal(kb, (1,), jnp.float32) * 0.1,
        # BatchNorm2d(1) parameters / running stats (PyTorch defaults).
        "bn_gamma": jnp.ones((1,), jnp.float32),
        "bn_beta": jnp.zeros((1,), jnp.float32),
        "bn_mean": jnp.zeros((1,), jnp.float32),
        "bn_var": jnp.ones((1,), jnp.float32),
    }


# ---------------------------------------------------------------------------
# Pure-JAX reference (built-in correctness check)
# ---------------------------------------------------------------------------

def merge_block_reference(params, x, *, eps=1e-5):
    w = params["conv_w"].reshape(1, 1, 3, 3)
    y = jax.lax.conv_general_dilated(
        x, w, window_strides=(2, 2), padding=((1, 1), (1, 1)),
        dimension_numbers=("NCHW", "OIHW", "NCHW"))
    y = y + params["conv_b"].reshape(1, 1, 1, 1)
    scale = (params["bn_gamma"] / jnp.sqrt(params["bn_var"] + eps)).reshape(1, 1, 1, 1)
    return (y - params["bn_mean"].reshape(1, 1, 1, 1)) * scale + params["bn_beta"].reshape(1, 1, 1, 1)


if __name__ == "__main__":
    key = jax.random.PRNGKey(0)
    kp, kx1, kx2 = jax.random.split(key, 3)

    params = init_params(kp)
    fwd = jax.jit(merge_block_forward)

    # Even spatial size.
    x = jax.random.normal(kx1, (2, 1, 16, 16), jnp.float32)
    y = fwd(params, x)
    jax.block_until_ready(y)
    assert y.shape == (2, 1, 8, 8)
    assert bool(jnp.all(jnp.isfinite(y)))
    y_ref = merge_block_reference(params, x)
    assert bool(jnp.allclose(y, y_ref, atol=1e-5, rtol=1e-5)), "mismatch vs reference (even)"

    # Odd spatial size (exercises the stride-2 boundary / padding handling).
    x2 = jax.random.normal(kx2, (2, 1, 15, 13), jnp.float32)
    y2 = fwd(params, x2)
    jax.block_until_ready(y2)
    assert y2.shape == (2, 1, 8, 7)
    y2_ref = merge_block_reference(params, x2)
    assert bool(jnp.allclose(y2, y2_ref, atol=1e-5, rtol=1e-5)), "mismatch vs reference (odd)"

    print("KERNEL_OK")
</pallas_src>

<mosaic_0001>
module attributes {stable_mosaic.version = 11 : i64} {
  func.func @_merge_block_kernel(%arg0: i32, %arg1: memref<16xf32, #tpu.memory_space<smem>>, %arg2: memref<1x4x9x9xf32, #tpu.memory_space<vmem>>, %arg3: memref<1x8x8xf32, #tpu.memory_space<vmem>>) attributes {dimension_semantics = [#tpu.dimension_semantics<parallel>], iteration_bounds = array<i64: 2>, scalar_prefetch = 0 : i64, scratch_operands = 0 : i64, tpu.core_type = #tpu.core_type<tc>, window_params = [{transform_indices = @transform_0, window_bounds = array<i64: 16>}, {transform_indices = @transform_1, window_bounds = array<i64: 1, 4, 9, 9>}, {transform_indices = @transform_2, window_bounds = array<i64: 1, 8, 8>}]} {
    %c9 = arith.constant 9 : index
    %0 = memref.load %arg1[%c9] : memref<16xf32, #tpu.memory_space<smem>>
    %1 = vector.broadcast %0 : f32 to vector<8x8xf32>
    %c0 = arith.constant 0 : index
    %c0_0 = arith.constant 0 : index
    %c0_1 = arith.constant 0 : index
    %c0_2 = arith.constant 0 : index
    %2 = vector.load %arg2[%c0, %c0_0, %c0_1, %c0_2] : memref<1x4x9x9xf32, #tpu.memory_space<vmem>>, vector<1x1x8x8xf32>
    %3 = vector.shape_cast %2 : vector<1x1x8x8xf32> to vector<8x8xf32>
    %c0_3 = arith.constant 0 : index
    %4 = memref.load %arg1[%c0_3] : memref<16xf32, #tpu.memory_space<smem>>
    %5 = vector.broadcast %4 : f32 to vector<8x8xf32>
    %6 = arith.mulf %3, %5 : vector<8x8xf32>
    %7 = arith.addf %1, %6 : vector<8x8xf32>
    %c0_4 = arith.constant 0 : index
    %c1 = arith.constant 1 : index
    %c0_5 = arith.constant 0 : index
    %c0_6 = arith.constant 0 : index
    %8 = vector.load %arg2[%c0_4, %c1, %c0_5, %c0_6] : memref<1x4x9x9xf32, #tpu.memory_space<vmem>>, vector<1x1x8x8xf32>
    %9 = vector.shape_cast %8 : vector<1x1x8x8xf32> to vector<8x8xf32>
    %c1_7 = arith.constant 1 : index
    %10 = memref.load %arg1[%c1_7] : memref<16xf32, #tpu.memory_space<smem>>
    %11 = vector.broadcast %10 : f32 to vector<8x8xf32>
    %12 = arith.mulf %9, %11 : vector<8x8xf32>
    %13 = arith.addf %7, %12 : vector<8x8xf32>
    %c0_8 = arith.constant 0 : index
    %c0_9 = arith.constant 0 : index
    %c0_10 = arith.constant 0 : index
    %c1_11 = arith.constant 1 : index
    %14 = vector.load %arg2[%c0_8, %c0_9, %c0_10, %c1_11] : memref<1x4x9x9xf32, #tpu.memory_space<vmem>>, vector<1x1x8x8xf32>
    %15 = vector.shape_cast %14 : vector<1x1x8x8xf32> to vector<8x8xf32>
    %c2 = arith.constant 2 : index
    %16 = memref.load %arg1[%c2] : memref<16xf32, #tpu.memory_space<smem>>
    %17 = vector.broadcast %16 : f32 to vector<8x8xf32>
    %18 = arith.mulf %15, %17 : vector<8x8xf32>
    %19 = arith.addf %13, %18 : vector<8x8xf32>
    %c0_12 = arith.constant 0 : index
    %c2_13 = arith.constant 2 : index
    %c0_14 = arith.constant 0 : index
    %c0_15 = arith.constant 0 : index
    %20 = vector.load %arg2[%c0_12, %c2_13, %c0_14, %c0_15] : memref<1x4x9x9xf32, #tpu.memory_space<vmem>>, vector<1x1x8x8xf32>
    %21 = vector.shape_cast %20 : vector<1x1x8x8xf32> to vector<8x8xf32>
    %c3 = arith.constant 3 : index
    %22 = memref.load %arg1[%c3] : memref<16xf32, #tpu.memory_space<smem>>
    %23 = vector.broadcast %22 : f32 to vector<8x8xf32>
    %24 = arith.mulf %21, %23 : vector<8x8xf32>
    %25 = arith.addf %19, %24 : vector<8x8xf32>
    %c0_16 = arith.constant 0 : index
    %c3_17 = arith.constant 3 : index
    %c0_18 = arith.constant 0 : index
    %c0_19 = arith.constant 0 : index
    %26 = vector.load %arg2[%c0_16, %c3_17, %c0_18, %c0_19] : memref<1x4x9x9xf32, #tpu.memory_space<vmem>>, vector<1x1x8x8xf32>
    %27 = vector.shape_cast %26 : vector<1x1x8x8xf32> to vector<8x8xf32>
    %c4 = arith.constant 4 : index
    %28 = memref.load %arg1[%c4] : memref<16xf32, #tpu.memory_space<smem>>
    %29 = vector.broadcast %28 : f32 to vector<8x8xf32>
    %30 = arith.mulf %27, %29 : vector<8x8xf32>
    %31 = arith.addf %25, %30 : vector<8x8xf32>
    %c0_20 = arith.constant 0 : index
    %c2_21 = arith.constant 2 : index
    %c0_22 = arith.constant 0 : index
    %c1_23 = arith.constant 1 : index
    %32 = vector.load %arg2[%c0_20, %c2_21, %c0_22, %c1_23] : memref<1x4x9x9xf32, #tpu.memory_space<vmem>>, vector<1x1x8x8xf32>
    %33 = vector.shape_cast %32 : vector<1x1x8x8xf32> to vector<8x8xf32>
    %c5 = arith.constant 5 : index
    %34 = memref.load %arg1[%c5] : memref<16xf32, #tpu.memory_space<smem>>
    %35 = vector.broadcast %34 : f32 to vector<8x8xf32>
    %36 = arith.mulf %33, %35 : vector<8x8xf32>
    %37 = arith.addf %31, %36 : vector<8x8xf32>
    %c0_24 = arith.constant 0 : index
    %c0_25 = arith.constant 0 : index
    %c1_26 = arith.constant 1 : index
    %c0_27 = arith.constant 0 : index
    %38 = vector.load %arg2[%c0_24, %c0_25, %c1_26, %c0_27] : memref<1x4x9x9xf32, #tpu.memory_space<vmem>>, vector<1x1x8x8xf32>
    %39 = vector.shape_cast %38 : vector<1x1x8x8xf32> to vector<8x8xf32>
    %c6 = arith.constant 6 : index
    %40 = memref.load %arg1[%c6] : memref<16xf32, #tpu.memory_space<smem>>
    %41 = vector.broadcast %40 : f32 to vector<8x8xf32>
    %42 = arith.mulf %39, %41 : vector<8x8xf32>
    %43 = arith.addf %37, %42 : vector<8x8xf32>
    %c0_28 = arith.constant 0 : index
    %c1_29 = arith.constant 1 : index
    %c1_30 = arith.constant 1 : index
    %c0_31 = arith.constant 0 : index
    %44 = vector.load %arg2[%c0_28, %c1_29, %c1_30, %c0_31] : memref<1x4x9x9xf32, #tpu.memory_space<vmem>>, vector<1x1x8x8xf32>
    %45 = vector.shape_cast %44 : vector<1x1x8x8xf32> to vector<8x8xf32>
    %c7 = arith.constant 7 : index
    %46 = memref.load %arg1[%c7] : memref<16xf32, #tpu.memory_space<smem>>
    %47 = vector.broadcast %46 : f32 to vector<8x8xf32>
    %48 = arith.mulf %45, %47 : vector<8x8xf32>
    %49 = arith.addf %43, %48 : vector<8x8xf32>
    %c0_32 = arith.constant 0 : index
    %c0_33 = arith.constant 0 : index
    %c1_34 = arith.constant 1 : index
    %c1_35 = arith.constant 1 : index
    %50 = vector.load %arg2[%c0_32, %c0_33, %c1_34, %c1_35] : memref<1x4x9x9xf32, #tpu.memory_space<vmem>>, vector<1x1x8x8xf32>
    %51 = vector.shape_cast %50 : vector<1x1x8x8xf32> to vector<8x8xf32>
    %c8 = arith.constant 8 : index
    %52 = memref.load %arg1[%c8] : memref<16xf32, #tpu.memory_space<smem>>
    %53 = vector.broadcast %52 : f32 to vector<8x8xf32>
    %54 = arith.mulf %51, %53 : vector<8x8xf32>
    %55 = arith.addf %49, %54 : vector<8x8xf32>
    %c0_36 = arith.constant 0 : index
    %c0_37 = arith.constant 0 : index
    %c0_38 = arith.constant 0 : index
    %56 = vector.load %arg3[%c0_36, %c0_37, %c0_38] : memref<1x8x8xf32, #tpu.memory_space<vmem>>, vector<1x8x8xf32>
    %57 = vector.shape_cast %56 : vector<1x8x8xf32> to vector<8x8xf32>
    %58 = vector.shape_cast %55 : vector<8x8xf32> to vector<1x8x8xf32>
    tpu.vector_store %arg3[%c0_36, %c0_37, %c0_38], %58 {strides = array<i32>} : memref<1x8x8xf32, #tpu.memory_space<vmem>>, vector<1x8x8xf32>,
    return
  }
  func.func @transform_0(%arg0: i32) -> i32 {
    %c0_i32 = arith.constant 0 : i32
    %c0_i32_0 = arith.constant 0 : i32
    return %c0_i32 : i32
  }
  func.func @transform_1(%arg0: i32) -> (i32, i32, i32, i32) {
    %c0_i32 = arith.constant 0 : i32
    %c0_i32_0 = arith.constant 0 : i32
    %c0_i32_1 = arith.constant 0 : i32
    %c0_i32_2 = arith.constant 0 : i32
    return %arg0, %c0_i32, %c0_i32_0, %c0_i32_1 : i32, i32, i32, i32
  }
  func.func @transform_2(%arg0: i32) -> (i32, i32, i32) {
    %c0_i32 = arith.constant 0 : i32
    %c0_i32_0 = arith.constant 0 : i32
    %c0_i32_1 = arith.constant 0 : i32
    return %arg0, %c0_i32, %c0_i32_0 : i32, i32, i32
  }
}

</mosaic_0001>

<llo_original>
// kernel: merge_block_forward.1
$region0: #{merge_block_forward.1}
  #allocation0 [shape = 'u32[]', space=smem, size = 0x4, offset = 0x4, fixed_abs, tag = 'smem constant byte address 0x4 - core index']
  #allocation1 [shape = 'u32[72,128]{1,0:T(1,128)}', space=vmem, size = 0x9000, scoped, tag = 'internal scratch']
  %s0 = inlined_call_operand.vmem [shape: f32[16], index: 0, kind: input, shape index: {}]
  %s1 = inlined_call_operand.vmem [shape: f32[2,4,9,9], index: 1, kind: input, shape index: {}]
  %s2 = inlined_call_operand.hbm [shape: f32[2,8,8], index: 2, kind: output, shape index: {}]
  %s3 = sld [smem:[#allocation0]]
  $region45: #{merge_block_forward.1} parent=0
    _
  %s5 = ssub.s32 1, %s3
  %s6 = scalar_select 0, %s5, %s3
  $region1: #{merge_block_forward.1} parent=0
    #allocation2 [shape = 'u8[512]{0}', space=smem, size = 0x200, scoped, tag = 'input window, operand 0, single buffered']
    #allocation3 [shape = 's32[2]{0}', space=sflag, size = 0x8, scoped, tag = 'scoped memory for merge_block_forward.1']
    #allocation4 [shape = 's32[2]{0}', space=sflag, size = 0x8, scoped, tag = 'scoped memory for merge_block_forward.1']
    #allocation5 [shape = 'u8[8192]{0}', space=vmem, size = 0x2000, scoped, tag = 'output window, operand 0']
    %7 = vsyncpa [#allocation4], 0
    %8 = vsyncpa [#allocation3], 0
    %s9 = scalar_lea.sflag [#allocation3], 1
    %10 = vsyncpa %s9, 0
    loop: start=0, step=1, limit=4
    $region2: #{merge_block_forward.1} parent=1 // loop_pre_header
      _
    $region3: #{merge_block_forward.1} parent=1 // loop_header
      %s12 = sphi 0, %s16
      %p13 = scmp.ge.s32.totalorder %s12, 4
      %s20 = sphi 0, %s20
      %s22 = sphi 0, %s20
      %s23 = sphi 0, %s22
      %s37 = sphi 0, %s23
      %s43 = sphi 0, %s45
      %s46 = sphi 0, %s43
      %s47 = sphi 0, %s46
      %s63 = sphi 0, %s47
      %s69 = sphi 0, %s71
      %s72 = sphi 0, %s69
      %s73 = sphi 0, %s72
      %s89 = sphi 0, %s73
    $region4: #{merge_block_forward.1} parent=1 // loop_header_branch
      %15 = sbr.rel (%p13) target = $region8
    $region5: #{merge_block_forward.1} parent=1 // loop_body
      %s17 = ssub.s32 %s12, 1
      %s18 = ssub.s32 %s12, 2
      %s19 = sadd.s32 %s12, 1
      %s21 = sadd.s32 %s20, 1
      %p24 = scmp.eq.s32.totalorder %s12, 1
      %p25 = scmp.ne.s32.totalorder %s20, %s22
      %p26 = scmp.eq.s32.totalorder %s12, 0
      %p27 = por %p25, %p26
      %p28 = scmp.ne.s32.totalorder %s20, %s22
      %p29 = scmp.eq.s32.totalorder %s17, 1
      %p30 = por %p28, %p29
      %p31 = scmp.ne.s32.totalorder %s22, %s23
      %p32 = scmp.eq.s32.totalorder %s17, 0
      %p33 = por %p31, %p32
      %p34 = scmp.ne.s32.totalorder %s22, %s23
      %p35 = scmp.eq.s32.totalorder %s18, 1
      %p36 = por %p34, %p35
      %p38 = scmp.ne.s32.totalorder %s23, %s37
      %p39 = scmp.eq.s32.totalorder %s18, 0
      %p40 = por %p38, %p39
      %s41 = ssub.s32 %s12, %s19
      %p42 = scmp.eq.s32.totalorder %s41, 0
      %s44 = sadd.s32 %s43, 1
      %s45 = scalar_select %p42, %s43, %s44
      %p48 = pneg %p42
      %p49 = scmp.eq.s32.totalorder %s12, 1
      %p50 = por %p48, %p49
      %p51 = scmp.ne.s32.totalorder %s43, %s46
      %p52 = scmp.eq.s32.totalorder %s12, 0
      %p53 = por %p51, %p52
      %p54 = scmp.ne.s32.totalorder %s43, %s46
      %p55 = scmp.eq.s32.totalorder %s17, 1
      %p56 = por %p54, %p55
      %p57 = scmp.ne.s32.totalorder %s46, %s47
      %p58 = scmp.eq.s32.totalorder %s17, 0
      %p59 = por %p57, %p58
      %p60 = scmp.ne.s32.totalorder %s46, %s47
      %p61 = scmp.eq.s32.totalorder %s18, 1
      %p62 = por %p60, %p61
      %p64 = scmp.ne.s32.totalorder %s47, %s63
      %p65 = scmp.eq.s32.totalorder %s18, 0
      %p66 = por %p64, %p65
      %s67 = ssub.s32 %s12, %s19
      %p68 = scmp.eq.s32.totalorder %s67, 0
      %s70 = sadd.s32 %s69, 1
      %s71 = scalar_select %p68, %s69, %s70
      %p74 = pneg %p68
      %p75 = scmp.eq.s32.totalorder %s12, 1
      %p76 = por %p74, %p75
      %p77 = scmp.ne.s32.totalorder %s69, %s72
      %p78 = scmp.eq.s32.totalorder %s12, 0
      %p79 = por %p77, %p78
      %p80 = scmp.ne.s32.totalorder %s69, %s72
      %p81 = scmp.eq.s32.totalorder %s17, 1
      %p82 = por %p80, %p81
      %p83 = scmp.ne.s32.totalorder %s72, %s73
      %p84 = scmp.eq.s32.totalorder %s17, 0
      %p85 = por %p83, %p84
      %p86 = scmp.ne.s32.totalorder %s72, %s73
      %p87 = scmp.eq.s32.totalorder %s18, 1
      %p88 = por %p86, %p87
      %p90 = scmp.ne.s32.totalorder %s73, %s89
      %p91 = scmp.eq.s32.totalorder %s18, 0
      %p92 = por %p90, %p91
      %p93 = scmp.le.s32.totalorder 1, %s12
      %p94 = scmp.lt.s32.totalorder %s12, 3
      %p95 = pnand %p93, %p94
      %p96 = pneg %p95
      // Predicated region
      $region9: #{merge_block_forward.1} parent=5 // pred_check
        _
      $region10: #{merge_block_forward.1} parent=5 // pred_check_branch
        %98 = sbr.rel (%p95) target = $region12
      $region11: #{merge_block_forward.1} parent=5 // pred_region
        %s99 = ssub.s32 %s12, 1
        // Predicated region
        $region13: #{merge_block_forward.1} parent=11 // pred_check
          %p100 = pneg %p33
        $region14: #{merge_block_forward.1} parent=11 // pred_check_branch
          %102 = sbr.rel (%p100) target = $region16
        $region15: #{merge_block_forward.1} parent=11 // pred_region
          %104 = vsyncadd [#allocation4], 0
          %s106 = sshll.u32 %s0, 4
          %s107 = int_to_ptr.vmem [resolvable:$true] %s106
          %109 = dma.vmem_to_smem %s107, 16, [#allocation2], [#allocation4]
        $region16: #{merge_block_forward.1} parent=11 // pred_fallthru
          _
      $region12: #{merge_block_forward.1} parent=5 // pred_fallthru
        _
      %p110 = scmp.lt.s32.totalorder %s12, 2
      // Predicated region
      $region17: #{merge_block_forward.1} parent=5 // pred_check
        %p111 = pneg %p110
      $region18: #{merge_block_forward.1} parent=5 // pred_check_branch
        %113 = sbr.rel (%p111) target = $region20
      $region19: #{merge_block_forward.1} parent=5 // pred_region
        // Predicated region
        $region21: #{merge_block_forward.1} parent=19 // pred_check
          %p114 = pneg %p53
        $region22: #{merge_block_forward.1} parent=19 // pred_check_branch
          %116 = sbr.rel (%p114) target = $region24
        $region23: #{merge_block_forward.1} parent=19 // pred_region
          %p117 = scmp.lt.s32.totalorder %s12, 1
          %s118 = scalar_select %p117, %s12, 1
          %s119 = smul.addr %s118, 8
          %s120 = smul.addr %s119, 8
          %s121 = scalar_lea.vmem %s1, %s120
        $region24: #{merge_block_forward.1} parent=19 // pred_fallthru
          _
      $region20: #{merge_block_forward.1} parent=5 // pred_fallthru
        _
      %p122 = scmp.le.s32.totalorder 1, %s12
      %p123 = scmp.lt.s32.totalorder %s12, 3
      %p124 = pnand %p122, %p123
      %p125 = pneg %p124
      // Predicated region
      $region25: #{merge_block_forward.1} parent=5 // pred_check
        _
      $region26: #{merge_block_forward.1} parent=5 // pred_check_branch
        %127 = sbr.rel (%p124) target = $region28
      $region27: #{merge_block_forward.1} parent=5 // pred_region
        %s128 = ssub.s32 %s12, 1
        // Predicated region
        $region29: #{merge_block_forward.1} parent=27 // pred_check
          %p129 = pneg %p33
        $region30: #{merge_block_forward.1} parent=27 // pred_check_branch
          %131 = sbr.rel (%p129) target = $region32
        $region31: #{merge_block_forward.1} parent=27 // pred_region
          %133 = dma.done [#allocation4], 16
        $region32: #{merge_block_forward.1} parent=27 // pred_fallthru
          _
        %134 = sfence
        %p135 = pneg %p33
        %p136 = pneg %p30
        %p137 = scmp.lt.s32.totalorder %s17, 1
        %s138 = scalar_select %p137, %s17, 1
        %s139 = smul.addr %s138, 8
        %s140 = smul.addr %s139, 8
        %s141 = scalar_lea.vmem %s1, %s140
        %p142 = pneg %p59
        %p143 = pneg %p56
        %p144 = pneg %p85
        %p145 = pneg %p82
        %s146 = sand.u32 %s72, 1
        %s147 = scalar_lea.sflag [#allocation3], %s146
        %s148 = sand.u32 %s72, 1
        %s149 = smul.addr %s148, 8
        %s150 = scalar_lea.vmem [#allocation5], %s149
        %p151 = scmp.lt.s32.totalorder %s17, 1
        %s152 = scalar_select %p151, %s17, 1
        %s153 = smul.addr %s152, 8
        %s154 = smul.addr %s153, 8
        %s155 = scalar_lea.vmem %s1, %s154
        %s156 = sld [smem:[#allocation2 + $0x9]]
        %v157 = vstv %s156
        %v158 = vld [vmem:[%s155] sm:$0xff]
        %s159 = sld [smem:[#allocation2]]
        %v160 = vstv %s159
        %v161 = vmul.f32 %v158, %v160
        %v162 = vadd.f32 %v157, %v161
        %s163 = scalar_lea.vmem %s155, 16
        %v164 = vld [vmem:[%s163] sm:$0xff]
        %s165 = sld [smem:[#allocation2 + $0x1]]
        %v166 = vstv %s165
        %v167 = vmul.f32 %v164, %v166
        %v168 = vadd.f32 %v162, %v167
        %s169 = sld [smem:[#allocation2 + $0x2]]
        %v170 = vstv %s169
        %v171 = vmul.f32 %v158, %v170
        %173 = vrot.lane.b32.xlu0 %v171, 127
        %v174 = vpop.permute.xlu0 %173
        %v176 = vadd.f32 %v168, %v174
        %s177 = scalar_lea.vmem %s155, 32
        %v178 = vld [vmem:[%s177] sm:$0xff]
        %s179 = sld [smem:[#allocation2 + $0x3]]
        %v180 = vstv %s179
        %v181 = vmul.f32 %v178, %v180
        %v182 = vadd.f32 %v176, %v181
        %s183 = scalar_lea.vmem %s155, 48
        %v184 = vld [vmem:[%s183] sm:$0xff]
        %s185 = sld [smem:[#allocation2 + $0x4]]
        %v186 = vstv %s185
        %v187 = vmul.f32 %v184, %v186
        %v188 = vadd.f32 %v182, %v187
        %s189 = sld [smem:[#allocation2 + $0x5]]
        %v190 = vstv %s189
        %v191 = vmul.f32 %v178, %v190
        %193 = vrot.lane.b32.xlu0 %v191, 127
        %v194 = vpop.permute.xlu0 %193
        %v196 = vadd.f32 %v188, %v194
        %v197 = vld [vmem:[%s155 + $0x1] sm:$0xff]
        %s198 = sld [smem:[#allocation2 + $0x6]]
        %v199 = vstv %s198
        %v200 = vmul.f32 %v197, %v199
        %v201 = vadd.f32 %v196, %v200
        %v202 = vld [vmem:[%s163 + $0x1] sm:$0xff]
        %s203 = sld [smem:[#allocation2 + $0x7]]
        %v204 = vstv %s203
        %v205 = vmul.f32 %v202, %v204
        %v206 = vadd.f32 %v201, %v205
        %s207 = sld [smem:[#allocation2 + $0x8]]
        %v208 = vstv %s207
        %v209 = vmul.f32 %v197, %v208
        %211 = vrot.lane.b32.xlu0 %v209, 127
        %v212 = vpop.permute.xlu0 %211
        %v214 = vadd.f32 %v206, %v212
        %vm215 = vcmask 64512
        %216 = vst.msk [vmem:[%s150] sm:$0xff] %vm215, %v214
        %s217 = sand.u32 %s72, 1
        %s218 = scalar_lea.sflag [#allocation3], %s217
        %s219 = sand.u32 %s72, 1
        %s220 = smul.addr %s219, 8
        %s221 = scalar_lea.vmem [#allocation5], %s220
        // Predicated region
        $region33: #{merge_block_forward.1} parent=27 // pred_check
          %p222 = pneg %p82
        $region34: #{merge_block_forward.1} parent=27 // pred_check_branch
          %224 = sbr.rel (%p222) target = $region36
        $region35: #{merge_block_forward.1} parent=27 // pred_region
          %226 = vsyncadd %s218, 0
          %s227 = smul.addr %s17, 8
          %s228 = scalar_lea.hbm %s2, %s227
          %s230 = sshll.u32 %s221, 4
          %s231 = int_to_ptr.vmem [resolvable:$true] %s230
          %s232 = sshll.u32 %s228, 4
          %s233 = int_to_ptr.hbm [resolvable:$true] %s232
          %235 = dma.vmem_to_hbm [thread:$0]  %s231, 128, %s233, %s218
        $region36: #{merge_block_forward.1} parent=27 // pred_fallthru
          _
      $region28: #{merge_block_forward.1} parent=5 // pred_fallthru
        _
      %p236 = scmp.le.s32.totalorder 2, %s12
      // Predicated region
      $region37: #{merge_block_forward.1} parent=5 // pred_check
        %p237 = pneg %p236
      $region38: #{merge_block_forward.1} parent=5 // pred_check_branch
        %239 = sbr.rel (%p237) target = $region40
      $region39: #{merge_block_forward.1} parent=5 // pred_region
        %s240 = ssub.s32 %s12, 2
        // Predicated region
        $region41: #{merge_block_forward.1} parent=39 // pred_check
          %p241 = pneg %p88
        $region42: #{merge_block_forward.1} parent=39 // pred_check_branch
          %243 = sbr.rel (%p241) target = $region44
        $region43: #{merge_block_forward.1} parent=39 // pred_region
          %s244 = sand.u32 %s73, 1
          %s245 = scalar_lea.sflag [#allocation3], %s244
          %s246 = sand.u32 %s73, 1
          %s247 = smul.addr %s246, 8
          %s248 = scalar_lea.vmem [#allocation5], %s247
          %250 = dma.done %s245, 128
        $region44: #{merge_block_forward.1} parent=39 // pred_fallthru
          _
      $region40: #{merge_block_forward.1} parent=5 // pred_fallthru
        _
    $region6: #{merge_block_forward.1} parent=1 // loop_footer
      %s16 = sadd.s32 1, %s12
    $region7: #{merge_block_forward.1} parent=1 // loop_footer_branch
      %11 = sbr.rel target = $region3
    $region8: #{merge_block_forward.1} parent=1 // loop_exit
      _
    %251 = vsyncpa [#allocation3], 1
    %s252 = scalar_lea.sflag [#allocation3], 1
    %253 = vsyncpa %s252, 1
    %254 = vsyncpa [#allocation4], 1
    %s255 = scalar_lea.sflag [#allocation4], 1
    %256 = vsyncpa %s255, 1

</llo_original>
